<compile_context>
chip_gen: v6e
topology: v6e:2x2x1
jax: 0.10.0
libtpu: 0.0.40
codegen_flags: <defaults>
</compile_context>

<pallas_src>
import jax
import jax.numpy as jnp
from jax.experimental import pallas as pl
from jax.experimental.pallas import tpu as pltpu


def recommender_kernel(users_ref, items_ref,     # scalar-prefetch SMEM int32 [Bp]
                       utab_hbm, itab_hbm,       # HBM refs [n_users,E], [n_items,E]
                       wu_ref, wi_ref,           # VMEM [1, E] each (f32, resident)
                       b_ref,                    # SMEM [1, 1] (f32)
                       out_ref,                  # VMEM [1, 1, TILE_B] (f32)
                       ubuf, ibuf,               # VMEM scratch [TILE_B, E] (f32)
                       dsem):                    # DMA semaphores [2]
    tile_b = out_ref.shape[-1]
    base = pl.program_id(0) * tile_b

    # Issue all 2*TILE_B row-gather DMAs back-to-back so they are in flight
    # together; per-descriptor fixed cost dominates for E-float rows, so depth
    # matters more than anything else here.
    @pl.loop(0, tile_b)
    def _issue(r):
        u_idx = users_ref[base + r]
        i_idx = items_ref[base + r]
        pltpu.make_async_copy(utab_hbm.at[u_idx], ubuf.at[r], dsem.at[0]).start()
        pltpu.make_async_copy(itab_hbm.at[i_idx], ibuf.at[r], dsem.at[1]).start()

    # Drain: one wait per issued copy (same row shape -> same byte count on
    # the shared semaphore; the src ref only supplies the shape).
    @pl.loop(0, tile_b)
    def _drain(r):
        pltpu.make_async_copy(utab_hbm.at[0], ubuf.at[r], dsem.at[0]).wait()
        pltpu.make_async_copy(itab_hbm.at[0], ibuf.at[r], dsem.at[1]).wait()

    # Linear(2E, 1) with the concat folded away:
    #   out = u_emb @ w[:E] + i_emb @ w[E:] + b
    # as one fused VPU multiply-add + one cross-lane (XLU) reduction.
    fused = ubuf[...] * wu_ref[...] + ibuf[...] * wi_ref[...]    # [tile_b, E]
    score = jnp.sum(fused, axis=-1)                              # [tile_b]
    out_ref[...] = (score + b_ref[0, 0])[None, None, :]


def recommender_forward(users, items, user_table, item_table, w, b, *, tile_b=128):
    """users, items: int [B]; user_table [n_users,E]; item_table [n_items,E];
    w: [2E, 1] (transpose of PyTorch's fc.weight [1, 2E]); b: [1].
    Returns float32 [B, 1]."""
    B = users.shape[0]
    n_users, E = user_table.shape
    n_items, _ = item_table.shape

    num_tiles = pl.cdiv(B, tile_b)
    Bp = num_tiles * tile_b

    # Clamp (PyTorch would raise on OOB; the DMA gather must stay in bounds)
    # and pad the index arrays up to a whole number of batch tiles.
    users_i = jnp.clip(users.astype(jnp.int32), 0, n_users - 1)
    items_i = jnp.clip(items.astype(jnp.int32), 0, n_items - 1)
    users_p = jnp.pad(users_i, (0, Bp - B))
    items_p = jnp.pad(items_i, (0, Bp - B))

    # Split the fc weight so no concat is needed in-kernel.
    wu = w[:E].reshape(1, E).astype(jnp.float32)
    wi = w[E:].reshape(1, E).astype(jnp.float32)
    b2d = b.reshape(1, 1).astype(jnp.float32)

    grid_spec = pltpu.PrefetchScalarGridSpec(
        num_scalar_prefetch=2,            # users, items -> SMEM
        grid=(num_tiles,),
        in_specs=[
            pl.BlockSpec(memory_space=pl.ANY),                  # user table (HBM)
            pl.BlockSpec(memory_space=pl.ANY),                  # item table (HBM)
            pl.BlockSpec((1, E), lambda t, u, i: (0, 0)),       # w_u (VMEM, resident)
            pl.BlockSpec((1, E), lambda t, u, i: (0, 0)),       # w_i (VMEM, resident)
            pl.BlockSpec(memory_space=pltpu.MemorySpace.SMEM),  # bias scalar
        ],
        out_specs=pl.BlockSpec((1, 1, tile_b), lambda t, u, i: (t, 0, 0)),
        scratch_shapes=[
            pltpu.VMEM((tile_b, E), jnp.float32),   # gathered user rows
            pltpu.VMEM((tile_b, E), jnp.float32),   # gathered item rows
            pltpu.SemaphoreType.DMA((2,)),          # [0]=user copies, [1]=item copies
        ],
    )

    out = pl.pallas_call(
        recommender_kernel,
        out_shape=jax.ShapeDtypeStruct((num_tiles, 1, tile_b), jnp.float32),
        grid_spec=grid_spec,
        compiler_params=pltpu.CompilerParams(
            dimension_semantics=("parallel",)),
    )(users_p, items_p,
      user_table.astype(jnp.float32), item_table.astype(jnp.float32),
      wu, wi, b2d)

    # Lane-dense (num_tiles, 1, tile_b) slab -> [B, 1]
    return out.reshape(Bp, 1)[:B]


if __name__ == "__main__":
    # Small, deterministic synthetic setup (no checkpoint loading).
    embedding_size = 50
    n_users = 12
    n_items = 16
    batch = 20          # not a multiple of 8 -> exercises padding

    key = jax.random.PRNGKey(0)
    k1, k2, k3, k4, k5, k6 = jax.random.split(key, 6)

    # nn.Embedding default init ~ N(0, 1); nn.Linear ~ U(-1/sqrt(in), 1/sqrt(in))
    user_table = jax.random.normal(k1, (n_users, embedding_size), jnp.float32)
    item_table = jax.random.normal(k2, (n_items, embedding_size), jnp.float32)
    bound = 1.0 / jnp.sqrt(2.0 * embedding_size)
    w = jax.random.uniform(k3, (2 * embedding_size, 1), jnp.float32,
                           minval=-bound, maxval=bound)
    b = jax.random.uniform(k4, (1,), jnp.float32, minval=-bound, maxval=bound)

    users = jax.random.randint(k5, (batch,), 0, n_users, jnp.int32)
    items = jax.random.randint(k6, (batch,), 0, n_items, jnp.int32)

    # Pure-JAX reference (embedding lookup + concat + linear).
    ref = jnp.concatenate([user_table[users], item_table[items]], axis=1) @ w + b

    # Small tile: exercises a 3-step grid + index padding.
    out_small = recommender_forward(users, items, user_table, item_table, w, b,
                                    tile_b=8)
    out_small = jax.block_until_ready(out_small)
    assert out_small.shape == (batch, 1)
    assert jnp.allclose(out_small, ref, atol=1e-5), "mismatch vs reference (tile_b=8)"

    # Default (performance) tile: single lane-dense 128-wide tile.
    out_big = recommender_forward(users, items, user_table, item_table, w, b)
    out_big = jax.block_until_ready(out_big)
    assert out_big.shape == (batch, 1)
    assert jnp.allclose(out_big, ref, atol=1e-5), "mismatch vs reference (tile_b=128)"

    print("KERNEL_OK")
</pallas_src>

<mosaic_0001>
module attributes {stable_mosaic.version = 11 : i64} {
  func.func @recommender_kernel(%arg0: i32, %arg1: memref<24xi32, #tpu.memory_space<smem>>, %arg2: memref<24xi32, #tpu.memory_space<smem>>, %arg3: memref<12x50xf32, #tpu.memory_space<any>>, %arg4: memref<16x50xf32, #tpu.memory_space<any>>, %arg5: memref<1x50xf32, #tpu.memory_space<vmem>>, %arg6: memref<1x50xf32, #tpu.memory_space<vmem>>, %arg7: memref<1x1xf32, #tpu.memory_space<smem>>, %arg8: memref<1x1x8xf32, #tpu.memory_space<vmem>>, %arg9: memref<8x50xf32, #tpu.memory_space<vmem>>, %arg10: memref<8x50xf32, #tpu.memory_space<vmem>>, %arg11: memref<2x!tpu.dma_semaphore, #tpu.memory_space<semaphore_mem>>) attributes {dimension_semantics = [#tpu.dimension_semantics<parallel>], iteration_bounds = array<i64: 3>, scalar_prefetch = 2 : i64, scratch_operands = 3 : i64, tpu.core_type = #tpu.core_type<tc>, window_params = [{}, {}, {pipeline_mode = #tpu.pipeline_mode<synchronous>, transform_indices = @transform_2, window_bounds = array<i64: 1, 50>}, {pipeline_mode = #tpu.pipeline_mode<synchronous>, transform_indices = @transform_3, window_bounds = array<i64: 1, 50>}, {transform_indices = @transform_4, window_bounds = array<i64: 1, 1>}, {transform_indices = @transform_5, window_bounds = array<i64: 1, 1, 8>}]} {
    %c8_i32 = arith.constant 8 : i32
    %0 = arith.muli %arg0, %c8_i32 : i32
    %c0_i32 = arith.constant 0 : i32
    %c8_i32_0 = arith.constant 8 : i32
    %1 = arith.addi %c0_i32, %c8_i32_0 : i32
    %c1_i32 = arith.constant 1 : i32
    scf.for %arg12 = %c0_i32 to %1 step %c1_i32  : i32 {
      %c1_i32_18 = arith.constant 1 : i32
      %18 = arith.muli %arg12, %c1_i32_18 : i32
      %c0_i32_19 = arith.constant 0 : i32
      %19 = arith.addi %c0_i32_19, %18 : i32
      %20 = arith.addi %0, %19 : i32
      %21 = arith.index_cast %20 : i32 to index
      %22 = memref.load %arg1[%21] : memref<24xi32, #tpu.memory_space<smem>>
      %23 = arith.addi %0, %19 : i32
      %24 = arith.index_cast %23 : i32 to index
      %25 = memref.load %arg2[%24] : memref<24xi32, #tpu.memory_space<smem>>
      %c0_i32_20 = arith.constant 0 : i32
      %c0_i32_21 = arith.constant 0 : i32
      %26 = tpu.memref_slice %arg3[%22, %c0_i32_21] : memref<12x50xf32, #tpu.memory_space<any>> -> memref<1x50xf32, #tpu.memory_space<any>>
      %27 = tpu.memref_squeeze %26 : memref<1x50xf32, #tpu.memory_space<any>> -> memref<50xf32, #tpu.memory_space<any>>
      %c0_i32_22 = arith.constant 0 : i32
      %28 = tpu.memref_slice %arg9[%19, %c0_i32_22] : memref<8x50xf32, #tpu.memory_space<vmem>> -> memref<1x50xf32, #tpu.memory_space<vmem>>
      %29 = tpu.memref_squeeze %28 : memref<1x50xf32, #tpu.memory_space<vmem>> -> memref<50xf32, #tpu.memory_space<vmem>>
      %30 = tpu.memref_slice %arg11[%c0_i32_20] : memref<2x!tpu.dma_semaphore, #tpu.memory_space<semaphore_mem>> -> memref<1x!tpu.dma_semaphore, #tpu.memory_space<semaphore_mem>>
      %31 = tpu.memref_squeeze %30 : memref<1x!tpu.dma_semaphore, #tpu.memory_space<semaphore_mem>> -> memref<!tpu.dma_semaphore, #tpu.memory_space<semaphore_mem>>
      tpu.enqueue_dma source(%27 : memref<50xf32, #tpu.memory_space<any>>) target(%29 : memref<50xf32, #tpu.memory_space<vmem>>) target_semaphore(%31 : memref<!tpu.dma_semaphore, #tpu.memory_space<semaphore_mem>>)
      %c1_i32_23 = arith.constant 1 : i32
      %c0_i32_24 = arith.constant 0 : i32
      %32 = tpu.memref_slice %arg4[%25, %c0_i32_24] : memref<16x50xf32, #tpu.memory_space<any>> -> memref<1x50xf32, #tpu.memory_space<any>>
      %33 = tpu.memref_squeeze %32 : memref<1x50xf32, #tpu.memory_space<any>> -> memref<50xf32, #tpu.memory_space<any>>
      %c0_i32_25 = arith.constant 0 : i32
      %34 = tpu.memref_slice %arg10[%19, %c0_i32_25] : memref<8x50xf32, #tpu.memory_space<vmem>> -> memref<1x50xf32, #tpu.memory_space<vmem>>
      %35 = tpu.memref_squeeze %34 : memref<1x50xf32, #tpu.memory_space<vmem>> -> memref<50xf32, #tpu.memory_space<vmem>>
      %36 = tpu.memref_slice %arg11[%c1_i32_23] : memref<2x!tpu.dma_semaphore, #tpu.memory_space<semaphore_mem>> -> memref<1x!tpu.dma_semaphore, #tpu.memory_space<semaphore_mem>>
      %37 = tpu.memref_squeeze %36 : memref<1x!tpu.dma_semaphore, #tpu.memory_space<semaphore_mem>> -> memref<!tpu.dma_semaphore, #tpu.memory_space<semaphore_mem>>
      tpu.enqueue_dma source(%33 : memref<50xf32, #tpu.memory_space<any>>) target(%35 : memref<50xf32, #tpu.memory_space<vmem>>) target_semaphore(%37 : memref<!tpu.dma_semaphore, #tpu.memory_space<semaphore_mem>>)
    }
    %c8_i32_1 = arith.constant 8 : i32
    %c0_i32_2 = arith.constant 0 : i32
    %c8_i32_3 = arith.constant 8 : i32
    %2 = arith.addi %c0_i32_2, %c8_i32_3 : i32
    %c1_i32_4 = arith.constant 1 : i32
    scf.for %arg12 = %c0_i32_2 to %2 step %c1_i32_4  : i32 {
      %c1_i32_18 = arith.constant 1 : i32
      %18 = arith.muli %arg12, %c1_i32_18 : i32
      %c0_i32_19 = arith.constant 0 : i32
      %19 = arith.addi %c0_i32_19, %18 : i32
      %c0_i32_20 = arith.constant 0 : i32
      %c0_i32_21 = arith.constant 0 : i32
      %c0_i32_22 = arith.constant 0 : i32
      %20 = tpu.memref_slice %arg3[%c0_i32_20, %c0_i32_22] : memref<12x50xf32, #tpu.memory_space<any>> -> memref<1x50xf32, #tpu.memory_space<any>>
      %21 = tpu.memref_squeeze %20 : memref<1x50xf32, #tpu.memory_space<any>> -> memref<50xf32, #tpu.memory_space<any>>
      %c0_i32_23 = arith.constant 0 : i32
      %22 = tpu.memref_slice %arg9[%19, %c0_i32_23] : memref<8x50xf32, #tpu.memory_space<vmem>> -> memref<1x50xf32, #tpu.memory_space<vmem>>
      %23 = tpu.memref_squeeze %22 : memref<1x50xf32, #tpu.memory_space<vmem>> -> memref<50xf32, #tpu.memory_space<vmem>>
      %24 = tpu.memref_slice %arg11[%c0_i32_21] : memref<2x!tpu.dma_semaphore, #tpu.memory_space<semaphore_mem>> -> memref<1x!tpu.dma_semaphore, #tpu.memory_space<semaphore_mem>>
      %25 = tpu.memref_squeeze %24 : memref<1x!tpu.dma_semaphore, #tpu.memory_space<semaphore_mem>> -> memref<!tpu.dma_semaphore, #tpu.memory_space<semaphore_mem>>
      tpu.wait_dma2 semaphore(%25 : memref<!tpu.dma_semaphore, #tpu.memory_space<semaphore_mem>>) src(%21 : memref<50xf32, #tpu.memory_space<any>>) dst(%23 : memref<50xf32, #tpu.memory_space<vmem>>)
      %c0_i32_24 = arith.constant 0 : i32
      %c1_i32_25 = arith.constant 1 : i32
      %c0_i32_26 = arith.constant 0 : i32
      %26 = tpu.memref_slice %arg4[%c0_i32_24, %c0_i32_26] : memref<16x50xf32, #tpu.memory_space<any>> -> memref<1x50xf32, #tpu.memory_space<any>>
      %27 = tpu.memref_squeeze %26 : memref<1x50xf32, #tpu.memory_space<any>> -> memref<50xf32, #tpu.memory_space<any>>
      %c0_i32_27 = arith.constant 0 : i32
      %28 = tpu.memref_slice %arg10[%19, %c0_i32_27] : memref<8x50xf32, #tpu.memory_space<vmem>> -> memref<1x50xf32, #tpu.memory_space<vmem>>
      %29 = tpu.memref_squeeze %28 : memref<1x50xf32, #tpu.memory_space<vmem>> -> memref<50xf32, #tpu.memory_space<vmem>>
      %30 = tpu.memref_slice %arg11[%c1_i32_25] : memref<2x!tpu.dma_semaphore, #tpu.memory_space<semaphore_mem>> -> memref<1x!tpu.dma_semaphore, #tpu.memory_space<semaphore_mem>>
      %31 = tpu.memref_squeeze %30 : memref<1x!tpu.dma_semaphore, #tpu.memory_space<semaphore_mem>> -> memref<!tpu.dma_semaphore, #tpu.memory_space<semaphore_mem>>
      tpu.wait_dma2 semaphore(%31 : memref<!tpu.dma_semaphore, #tpu.memory_space<semaphore_mem>>) src(%27 : memref<50xf32, #tpu.memory_space<any>>) dst(%29 : memref<50xf32, #tpu.memory_space<vmem>>)
    }
    %c8_i32_5 = arith.constant 8 : i32
    %c0 = arith.constant 0 : index
    %c0_6 = arith.constant 0 : index
    %3 = vector.load %arg9[%c0, %c0_6] : memref<8x50xf32, #tpu.memory_space<vmem>>, vector<8x50xf32>
    %c0_7 = arith.constant 0 : index
    %c0_8 = arith.constant 0 : index
    %4 = vector.load %arg5[%c0_7, %c0_8] : memref<1x50xf32, #tpu.memory_space<vmem>>, vector<1x50xf32>
    %5 = vector.broadcast %4 : vector<1x50xf32> to vector<8x50xf32>
    %6 = arith.mulf %3, %5 : vector<8x50xf32>
    %c0_9 = arith.constant 0 : index
    %c0_10 = arith.constant 0 : index
    %7 = vector.load %arg10[%c0_9, %c0_10] : memref<8x50xf32, #tpu.memory_space<vmem>>, vector<8x50xf32>
    %c0_11 = arith.constant 0 : index
    %c0_12 = arith.constant 0 : index
    %8 = vector.load %arg6[%c0_11, %c0_12] : memref<1x50xf32, #tpu.memory_space<vmem>>, vector<1x50xf32>
    %9 = vector.broadcast %8 : vector<1x50xf32> to vector<8x50xf32>
    %10 = arith.mulf %7, %9 : vector<8x50xf32>
    %11 = arith.addf %6, %10 : vector<8x50xf32>
    %cst = arith.constant dense<0.000000e+00> : vector<8xf32>
    %12 = vector.multi_reduction <add>, %11, %cst [1] : vector<8x50xf32> to vector<8xf32>
    %c0_13 = arith.constant 0 : index
    %c0_14 = arith.constant 0 : index
    %13 = memref.load %arg7[%c0_13, %c0_14] : memref<1x1xf32, #tpu.memory_space<smem>>
    %14 = vector.broadcast %13 : f32 to vector<8xf32>
    %15 = arith.addf %12, %14 : vector<8xf32>
    %16 = vector.shape_cast %15 : vector<8xf32> to vector<1x1x8xf32>
    %c0_15 = arith.constant 0 : index
    %c0_16 = arith.constant 0 : index
    %c0_17 = arith.constant 0 : index
    %17 = vector.load %arg8[%c0_15, %c0_16, %c0_17] : memref<1x1x8xf32, #tpu.memory_space<vmem>>, vector<1x1x8xf32>
    tpu.vector_store %arg8[%c0_15, %c0_16, %c0_17], %16 {strides = array<i32>} : memref<1x1x8xf32, #tpu.memory_space<vmem>>, vector<1x1x8xf32>,
    return
  }
  func.func @transform_2(%arg0: i32, %arg1: memref<24xi32, #tpu.memory_space<smem>>, %arg2: memref<24xi32, #tpu.memory_space<smem>>) -> (i32, i32) {
    %c0_i32 = arith.constant 0 : i32
    %c0_i32_0 = arith.constant 0 : i32
    %c0_i32_1 = arith.constant 0 : i32
    return %c0_i32, %c0_i32_0 : i32, i32
  }
  func.func @transform_3(%arg0: i32, %arg1: memref<24xi32, #tpu.memory_space<smem>>, %arg2: memref<24xi32, #tpu.memory_space<smem>>) -> (i32, i32) {
    %c0_i32 = arith.constant 0 : i32
    %c0_i32_0 = arith.constant 0 : i32
    %c0_i32_1 = arith.constant 0 : i32
    return %c0_i32, %c0_i32_0 : i32, i32
  }
  func.func @transform_4(%arg0: i32, %arg1: memref<24xi32, #tpu.memory_space<smem>>, %arg2: memref<24xi32, #tpu.memory_space<smem>>) -> (i32, i32) {
    %c0_i32 = arith.constant 0 : i32
    %c0_i32_0 = arith.constant 0 : i32
    %c0_i32_1 = arith.constant 0 : i32
    return %c0_i32, %c0_i32_0 : i32, i32
  }
  func.func @transform_5(%arg0: i32, %arg1: memref<24xi32, #tpu.memory_space<smem>>, %arg2: memref<24xi32, #tpu.memory_space<smem>>) -> (i32, i32, i32) {
    %c0_i32 = arith.constant 0 : i32
    %c0_i32_0 = arith.constant 0 : i32
    %c0_i32_1 = arith.constant 0 : i32
    return %arg0, %c0_i32, %c0_i32_0 : i32, i32, i32
  }
}

</mosaic_0001>

<llo_original>
// kernel: tpu_custom_call.1
$region0: #{tpu_custom_call.1}
  #allocation0 [shape = 'u32[]', space=smem, size = 0x4, offset = 0x4, fixed_abs, tag = 'smem constant byte address 0x4 - core index']
  #allocation1 [shape = 'u32[144,128]{1,0:T(1,128)}', space=vmem, size = 0x12000, scoped, tag = 'internal scratch']
  #allocation2 [shape = 'f32[8,50]{1,0:T(8,128)}', space=vmem, size = 0x1000, scoped, tag = 'scratch operand']
  #allocation3 [shape = 'f32[8,50]{1,0:T(8,128)}', space=vmem, size = 0x1000, scoped, tag = 'scratch operand']
  #allocation4 [shape = 's32[2]{0}', space=sflag, size = 0x8, scoped, tag = 'scratch operand']
  #allocation5 [shape = 's32[1]{0}', space=sflag, size = 0x4, scoped, tag = 'scoped memory for tpu_custom_call.1']
  #allocation6 [shape = 'u8[512]{0}', space=smem, size = 0x200, scoped, tag = 'prefetched SMEM operand 0']
  #allocation7 [shape = 'u8[512]{0}', space=smem, size = 0x200, scoped, tag = 'prefetched SMEM operand 1']
  #allocation8 [shape = 'f32[1,1]{1,0:T(1,128)S(6)}', space=smem, size = 0x200, scoped, tag = 'scoped memory for tpu_custom_call.1']
  #allocation11 [shape = 's32[]', space=sflag, size = 0x4, offset = 0, fixed_abs, tag = 'sflag constant byte address 0x0 - dummy sync flag']
  #allocation12 [shape = 's32[]', space=sflag, size = 0x4, offset = 0, fixed_abs, tag = 'sflag constant byte address 0x0 - dummy sync flag']
  #allocation13 [shape = 'u32[]', space=smem, size = 0x4, offset = 0x44, fixed_abs, tag = 'smem constant byte address 0x44 - assertion arg 0']
  #allocation14 [shape = 'u32[]', space=smem, size = 0x4, offset = 0x48, fixed_abs, tag = 'smem constant byte address 0x48 - assertion arg 1']
  #allocation15 [shape = 's32[]', space=sflag, size = 0x4, offset = 0, fixed_abs, tag = 'sflag constant byte address 0x0 - dummy sync flag']
  #allocation16 [shape = 's32[]', space=sflag, size = 0x4, offset = 0, fixed_abs, tag = 'sflag constant byte address 0x0 - dummy sync flag']
  %s0 = inlined_call_operand.vmem [shape: s32[24], index: 0, kind: input, shape index: {}]
  %s1 = inlined_call_operand.vmem [shape: s32[24], index: 1, kind: input, shape index: {}]
  %s2 = inlined_call_operand.hbm [shape: f32[12,50], index: 2, kind: input, shape index: {}]
  %s3 = inlined_call_operand.hbm [shape: f32[16,50], index: 3, kind: input, shape index: {}]
  %s4 = inlined_call_operand.vmem [shape: f32[1,50], index: 4, kind: input, shape index: {}]
  %s5 = inlined_call_operand.vmem [shape: f32[1,50], index: 5, kind: input, shape index: {}]
  %s6 = inlined_call_operand.<no memory space> [shape: f32[1,1], index: 6, kind: input, shape index: {}]
  %s7 = inlined_call_operand.hbm [shape: f32[3,1,8], index: 7, kind: output, shape index: {}]
  %s8 = sld [smem:[#allocation0]]
  $region67: #{tpu_custom_call.1} parent=0
    _
  %s10 = ssub.s32 1, %s8
  %s11 = scalar_select 0, %s10, %s8
  %s12 = sshll.u32 %s0, 4
  %s13 = int_to_ptr.vmem [resolvable:$true] %s12
  %15 = dma.vmem_to_smem %s13, 16, [#allocation6], [#allocation5]
  %s16 = sshll.u32 %s1, 4
  %s17 = int_to_ptr.vmem [resolvable:$true] %s16
  %19 = dma.vmem_to_smem %s17, 16, [#allocation7], [#allocation5]
  %20 = sst [smem:[#allocation8]] %s6
  %21 = dma.done [#allocation5], 32
  %22 = sfence
  $region1: #{tpu_custom_call.1} parent=0
    #allocation9 [shape = 'u8[1024]{0}', space=vmem, size = 0x400, scoped, tag = 'output window, operand 0']
    #allocation10 [shape = 's32[2]{0}', space=sflag, size = 0x8, scoped, tag = 'scoped memory for tpu_custom_call.1']
    %23 = vsyncpa [#allocation10], 0
    %s24 = scalar_lea.sflag [#allocation10], 1
    %25 = vsyncpa %s24, 0
    loop: start=0, step=1, limit=5
    $region2: #{tpu_custom_call.1} parent=1 // loop_pre_header
      _
    $region3: #{tpu_custom_call.1} parent=1 // loop_header
      %s27 = sphi 0, %s31
      %p28 = scmp.ge.s32.totalorder %s27, 5
      %s35 = sphi 0, %s35
      %s37 = sphi 0, %s35
      %s38 = sphi 0, %s37
      %s52 = sphi 0, %s38
      %s56 = sphi 0, %s56
      %s58 = sphi 0, %s56
      %s59 = sphi 0, %s58
      %s73 = sphi 0, %s59
      %s77 = sphi 0, %s77
      %s79 = sphi 0, %s77
      %s80 = sphi 0, %s79
      %s94 = sphi 0, %s80
      %s100 = sphi 0, %s102
      %s103 = sphi 0, %s100
      %s104 = sphi 0, %s103
      %s120 = sphi 0, %s104
    $region4: #{tpu_custom_call.1} parent=1 // loop_header_branch
      %30 = sbr.rel (%p28) target = $region8
    $region5: #{tpu_custom_call.1} parent=1 // loop_body
      %s32 = ssub.s32 %s27, 1
      %s33 = ssub.s32 %s27, 2
      %s34 = sadd.s32 %s27, 1
      %s36 = sadd.s32 %s35, 1
      %p39 = scmp.eq.s32.totalorder %s27, 2
      %p40 = scmp.ne.s32.totalorder %s35, %s37
      %p41 = scmp.eq.s32.totalorder %s27, 0
      %p42 = por %p40, %p41
      %p43 = scmp.ne.s32.totalorder %s35, %s37
      %p44 = scmp.eq.s32.totalorder %s32, 2
      %p45 = por %p43, %p44
      %p46 = scmp.ne.s32.totalorder %s37, %s38
      %p47 = scmp.eq.s32.totalorder %s32, 0
      %p48 = por %p46, %p47
      %p49 = scmp.ne.s32.totalorder %s37, %s38
      %p50 = scmp.eq.s32.totalorder %s33, 2
      %p51 = por %p49, %p50
      %p53 = scmp.ne.s32.totalorder %s38, %s52
      %p54 = scmp.eq.s32.totalorder %s33, 0
      %p55 = por %p53, %p54
      %s57 = sadd.s32 %s56, 1
      %p60 = scmp.eq.s32.totalorder %s27, 2
      %p61 = scmp.ne.s32.totalorder %s56, %s58
      %p62 = scmp.eq.s32.totalorder %s27, 0
      %p63 = por %p61, %p62
      %p64 = scmp.ne.s32.totalorder %s56, %s58
      %p65 = scmp.eq.s32.totalorder %s32, 2
      %p66 = por %p64, %p65
      %p67 = scmp.ne.s32.totalorder %s58, %s59
      %p68 = scmp.eq.s32.totalorder %s32, 0
      %p69 = por %p67, %p68
      %p70 = scmp.ne.s32.totalorder %s58, %s59
      %p71 = scmp.eq.s32.totalorder %s33, 2
      %p72 = por %p70, %p71
      %p74 = scmp.ne.s32.totalorder %s59, %s73
      %p75 = scmp.eq.s32.totalorder %s33, 0
      %p76 = por %p74, %p75
      %s78 = sadd.s32 %s77, 1
      %p81 = scmp.eq.s32.totalorder %s27, 2
      %p82 = scmp.ne.s32.totalorder %s77, %s79
      %p83 = scmp.eq.s32.totalorder %s27, 0
      %p84 = por %p82, %p83
      %p85 = scmp.ne.s32.totalorder %s77, %s79
      %p86 = scmp.eq.s32.totalorder %s32, 2
      %p87 = por %p85, %p86
      %p88 = scmp.ne.s32.totalorder %s79, %s80
      %p89 = scmp.eq.s32.totalorder %s32, 0
      %p90 = por %p88, %p89
      %p91 = scmp.ne.s32.totalorder %s79, %s80
      %p92 = scmp.eq.s32.totalorder %s33, 2
      %p93 = por %p91, %p92
      %p95 = scmp.ne.s32.totalorder %s80, %s94
      %p96 = scmp.eq.s32.totalorder %s33, 0
      %p97 = por %p95, %p96
      %s98 = ssub.s32 %s27, %s34
      %p99 = scmp.eq.s32.totalorder %s98, 0
      %s101 = sadd.s32 %s100, 1
      %s102 = scalar_select %p99, %s100, %s101
      %p105 = pneg %p99
      %p106 = scmp.eq.s32.totalorder %s27, 2
      %p107 = por %p105, %p106
      %p108 = scmp.ne.s32.totalorder %s100, %s103
      %p109 = scmp.eq.s32.totalorder %s27, 0
      %p110 = por %p108, %p109
      %p111 = scmp.ne.s32.totalorder %s100, %s103
      %p112 = scmp.eq.s32.totalorder %s32, 2
      %p113 = por %p111, %p112
      %p114 = scmp.ne.s32.totalorder %s103, %s104
      %p115 = scmp.eq.s32.totalorder %s32, 0
      %p116 = por %p114, %p115
      %p117 = scmp.ne.s32.totalorder %s103, %s104
      %p118 = scmp.eq.s32.totalorder %s33, 2
      %p119 = por %p117, %p118
      %p121 = scmp.ne.s32.totalorder %s104, %s120
      %p122 = scmp.eq.s32.totalorder %s33, 0
      %p123 = por %p121, %p122
      %p124 = scmp.le.s32.totalorder 1, %s27
      %p125 = scmp.lt.s32.totalorder %s27, 4
      %p126 = pnand %p124, %p125
      %p127 = pneg %p126
      // Predicated region
      $region9: #{tpu_custom_call.1} parent=5 // pred_check
        _
      $region10: #{tpu_custom_call.1} parent=5 // pred_check_branch
        %129 = sbr.rel (%p126) target = $region12
      $region11: #{tpu_custom_call.1} parent=5 // pred_region
        %s130 = ssub.s32 %s27, 1
        // Predicated region
        $region13: #{tpu_custom_call.1} parent=11 // pred_check
          %p131 = pneg %p48
        $region14: #{tpu_custom_call.1} parent=11 // pred_check_branch
          %133 = sbr.rel (%p131) target = $region16
        $region15: #{tpu_custom_call.1} parent=11 // pred_region
          _
        $region16: #{tpu_custom_call.1} parent=11 // pred_fallthru
          _
        // Predicated region
        $region17: #{tpu_custom_call.1} parent=11 // pred_check
          %p134 = pneg %p69
        $region18: #{tpu_custom_call.1} parent=11 // pred_check_branch
          %136 = sbr.rel (%p134) target = $region20
        $region19: #{tpu_custom_call.1} parent=11 // pred_region
          _
        $region20: #{tpu_custom_call.1} parent=11 // pred_fallthru
          _
        // Predicated region
        $region21: #{tpu_custom_call.1} parent=11 // pred_check
          %p137 = pneg %p90
        $region22: #{tpu_custom_call.1} parent=11 // pred_check_branch
          %139 = sbr.rel (%p137) target = $region24
        $region23: #{tpu_custom_call.1} parent=11 // pred_region
          _
        $region24: #{tpu_custom_call.1} parent=11 // pred_fallthru
          _
      $region12: #{tpu_custom_call.1} parent=5 // pred_fallthru
        _
      %p140 = scmp.lt.s32.totalorder %s27, 3
      // Predicated region
      $region25: #{tpu_custom_call.1} parent=5 // pred_check
        %p141 = pneg %p140
      $region26: #{tpu_custom_call.1} parent=5 // pred_check_branch
        %143 = sbr.rel (%p141) target = $region28
      $region27: #{tpu_custom_call.1} parent=5 // pred_region
        _
      $region28: #{tpu_custom_call.1} parent=5 // pred_fallthru
        _
      %p144 = scmp.le.s32.totalorder 1, %s27
      %p145 = scmp.lt.s32.totalorder %s27, 4
      %p146 = pnand %p144, %p145
      %p147 = pneg %p146
      // Predicated region
      $region29: #{tpu_custom_call.1} parent=5 // pred_check
        _
      $region30: #{tpu_custom_call.1} parent=5 // pred_check_branch
        %149 = sbr.rel (%p146) target = $region32
      $region31: #{tpu_custom_call.1} parent=5 // pred_region
        %s150 = ssub.s32 %s27, 1
        %p151 = pneg %p48
        %p152 = pneg %p45
        %p153 = pneg %p69
        %p154 = pneg %p66
        %p155 = pneg %p90
        %p156 = pneg %p87
        %p157 = pneg %p116
        %p158 = pneg %p113
        %s159 = sand.u32 %s103, 1
        %s160 = scalar_lea.sflag [#allocation10], %s159
        %s161 = sand.u32 %s103, 1
        %s162 = scalar_lea.vmem [#allocation9], %s161
        %s163 = smul.u32 %s32, 8
        loop: start=0, step=1, limit=8
        $region33: #{tpu_custom_call.1} parent=31 // loop_pre_header
          _
        $region34: #{tpu_custom_call.1} parent=31 // loop_header
          %s165 = sphi 0, %s169
          %p166 = scmp.ge.s32.totalorder %s165, 8
        $region35: #{tpu_custom_call.1} parent=31 // loop_header_branch
          %168 = sbr.rel (%p166) target = $region39
        $region36: #{tpu_custom_call.1} parent=31 // loop_body
          %s170 = sadd.s32 %s163, %s165
          %s171 = sld [smem:[#allocation6 + %s170]]
          %s172 = sld [smem:[#allocation7 + %s170]]
          %s173 = smul.addr %s171, 16
          %s174 = scalar_lea.hbm %s2, %s173
          %s175 = scalar_lea.vmem [#allocation2], %s165
          // Predicated region
          $region40: #{tpu_custom_call.1} parent=36 // pred_check
            _
          $region41: #{tpu_custom_call.1} parent=36 // pred_check_branch
            %177 = sbr.rel target = $region43
          $region42: #{tpu_custom_call.1} parent=36 // pred_region
            %178 = sst [smem:[#allocation13]] [#allocation12]
            %179 = sst [smem:[#allocation14]] [#allocation11]
          $region43: #{tpu_custom_call.1} parent=36 // pred_fallthru
            _
          %181 = shalt.err (0)
          %s183 = sshll.u32 %s175, 4
          %s184 = int_to_ptr.vmem [resolvable:$true] %s183
          %186 = dma.hbm_to_vmem [thread:$0]  %s174, 16, %s184, [#allocation4]
          %s187 = smul.addr %s172, 16
          %s188 = scalar_lea.hbm %s3, %s187
          %s189 = scalar_lea.vmem [#allocation3], %s165
          %s190 = scalar_lea.sflag [#allocation4], 1
          // Predicated region
          $region44: #{tpu_custom_call.1} parent=36 // pred_check
            _
          $region45: #{tpu_custom_call.1} parent=36 // pred_check_branch
            %192 = sbr.rel target = $region47
          $region46: #{tpu_custom_call.1} parent=36 // pred_region
            %193 = sst [smem:[#allocation13]] [#allocation16]
            %194 = sst [smem:[#allocation14]] [#allocation15]
          $region47: #{tpu_custom_call.1} parent=36 // pred_fallthru
            _
          %196 = shalt.err (0)
          %s198 = sshll.u32 %s189, 4
          %s199 = int_to_ptr.vmem [resolvable:$true] %s198
          %201 = dma.hbm_to_vmem [thread:$0]  %s188, 16, %s199, %s190
        $region37: #{tpu_custom_call.1} parent=31 // loop_footer
          %s169 = sadd.s32 1, %s165
        $region38: #{tpu_custom_call.1} parent=31 // loop_footer_branch
          %164 = sbr.rel target = $region34
        $region39: #{tpu_custom_call.1} parent=31 // loop_exit
          _
        loop: start=0, step=1, limit=8
        $region48: #{tpu_custom_call.1} parent=31 // loop_pre_header
          _
        $region49: #{tpu_custom_call.1} parent=31 // loop_header
          %s203 = sphi 0, %s207
          %p204 = scmp.ge.s32.totalorder %s203, 8
        $region50: #{tpu_custom_call.1} parent=31 // loop_header_branch
          %206 = sbr.rel (%p204) target = $region54
        $region51: #{tpu_custom_call.1} parent=31 // loop_body
          %209 = dma.done [#allocation4], 16
          %s210 = scalar_lea.sflag [#allocation4], 1
          %212 = dma.done %s210, 16
        $region52: #{tpu_custom_call.1} parent=31 // loop_footer
          %s207 = sadd.s32 1, %s203
        $region53: #{tpu_custom_call.1} parent=31 // loop_footer_branch
          %202 = sbr.rel target = $region49
        $region54: #{tpu_custom_call.1} parent=31 // loop_exit
          _
        %v213 = vld [vmem:[#allocation2] sm:$0xff]
        %v214 = vld [vmem:[%s4] sm:$0x1]
        %v216 = vlaneseq
        %v217 = vshrl.u32 %v216, 7
        %v218 = vsub.s32 0, %v217
        %v219 = vrot.slane %v214, %v218
        %v221 = vmul.f32 %v213, %v219
        %v222 = vld [vmem:[#allocation3] sm:$0xff]
        %v223 = vld [vmem:[%s5] sm:$0x1]
        %v225 = vlaneseq
        %v226 = vshrl.u32 %v225, 7
        %v227 = vsub.s32 0, %v226
        %v228 = vrot.slane %v223, %v227
        %v230 = vmul.f32 %v222, %v228
        %v231 = vadd.f32 %v221, %v230
        %vm232 = vcmask 408576
        %v233 = vsel %vm232, %v231, 0.0
        %234 = vadd.xlane.f32.xlu0 %v233
        %v235 = vpop.xlane.xlu0 %234
        %s236 = sld [smem:[#allocation8]]
        %v237 = vstv %s236
        %v238 = vadd.f32 %v235, %v237
        %v240 = vlaneseq
        %v241 = vand.u32 %v240, 127
        %v242 = vlaneseq
        %v243 = vshrl.u32 %v242, 7
        %v244 = vsub.s32 %v241, %v243
        %v245 = vrot.slane %v238, %v244
        %vm247 = vcmask 57344
        %248 = vst.msk [vmem:[%s162] sm:$0x1] %vm247, %v245
        %s249 = sand.u32 %s103, 1
        %s250 = scalar_lea.sflag [#allocation10], %s249
        %s251 = sand.u32 %s103, 1
        %s252 = scalar_lea.vmem [#allocation9], %s251
        // Predicated region
        $region55: #{tpu_custom_call.1} parent=31 // pred_check
          %p253 = pneg %p113
        $region56: #{tpu_custom_call.1} parent=31 // pred_check_branch
          %255 = sbr.rel (%p253) target = $region58
        $region57: #{tpu_custom_call.1} parent=31 // pred_region
          %s257 = ssub.s32 16, 16
          %258 = vsyncadd %s250, %s257
          %s259 = smul.addr %s32, 16
          %s260 = scalar_lea.hbm %s7, %s259
          %s262 = sshll.u32 %s252, 4
          %s263 = int_to_ptr.vmem [resolvable:$true] %s262
          %265 = dma.vmem_to_hbm [thread:$0]  %s263, 16, %s260, %s250
        $region58: #{tpu_custom_call.1} parent=31 // pred_fallthru
          _
      $region32: #{tpu_custom_call.1} parent=5 // pred_fallthru
        _
      %p266 = scmp.le.s32.totalorder 2, %s27
      // Predicated region
      $region59: #{tpu_custom_call.1} parent=5 // pred_check
        %p267 = pneg %p266
      $region60: #{tpu_custom_call.1} parent=5 // pred_check_branch
        %269 = sbr.rel (%p267) target = $region62
      $region61: #{tpu_custom_call.1} parent=5 // pred_region
        %s270 = ssub.s32 %s27, 2
        // Predicated region
        $region63: #{tpu_custom_call.1} parent=61 // pred_check
          %p271 = pneg %p119
        $region64: #{tpu_custom_call.1} parent=61 // pred_check_branch
          %273 = sbr.rel (%p271) target = $region66
        $region65: #{tpu_custom_call.1} parent=61 // pred_region
          %s274 = sand.u32 %s104, 1
          %s275 = scalar_lea.sflag [#allocation10], %s274
          %s276 = sand.u32 %s104, 1
          %s277 = scalar_lea.vmem [#allocation9], %s276
          %278 = dma.done %s275, 16
        $region66: #{tpu_custom_call.1} parent=61 // pred_fallthru
          _
      $region62: #{tpu_custom_call.1} parent=5 // pred_fallthru
        _
    $region6: #{tpu_custom_call.1} parent=1 // loop_footer
      %s31 = sadd.s32 1, %s27
    $region7: #{tpu_custom_call.1} parent=1 // loop_footer_branch
      %26 = sbr.rel target = $region3
    $region8: #{tpu_custom_call.1} parent=1 // loop_exit
      _
    %279 = vsyncpa [#allocation10], 1
    %s280 = scalar_lea.sflag [#allocation10], 1
    %281 = vsyncpa %s280, 1
  %282 = vsyncmov [#allocation4]
  %s283 = vpop.sfrf %282
  %p284 = scmp.eq.s32.totalorder %s283, 0
  %p285 = pneg %p284
  %287 = shalt.err (%p285)
  %s288 = scalar_lea.sflag [#allocation4], 1
  %289 = vsyncmov %s288
  %s290 = vpop.sfrf %289
  %p291 = scmp.eq.s32.totalorder %s290, 0
  %p292 = pneg %p291
  %294 = shalt.err (%p292)

</llo_original>
